<compile_context>
chip_gen: v5e
topology: v5e:2x2
jax: 0.10.0
libtpu: 0.0.40
codegen_flags: <defaults>
</compile_context>

<pallas_src>
import jax
import jax.numpy as jnp
from jax.experimental import pallas as pl
from jax.experimental.pallas import tpu as pltpu


# ------------------------------ fused kernel ------------------------------
# Per grid step i: a (row_tile, D) slab of z, the full (N, D) z, and the
# (resident) classifier weights.  Produces the (row_tile*N, 128) lane-dense
# padded output block.
def fused_decoder_kernel(zblk_ref, zall_ref, w1s_ref, b1_ref,
                         w2t_ref, b2_ref, w3p_ref, b3p_ref, out_ref):
    k = zblk_ref.shape[0]          # row_tile
    n = zall_ref.shape[0]          # N
    hdim = w2t_ref.shape[0]        # 128

    # adjacency row block: sigmoid(z_blk @ z_all^T) — contract last dims directly.
    s = jax.lax.dot_general(
        zblk_ref[...], zall_ref[...],
        (((1,), (1,)), ((), ())),
        preferred_element_type=jnp.float32)                    # (k, N)
    adj = jax.nn.sigmoid(s)

    # Layer 1 collapsed: each flattened row is a single adj scalar repeated over
    # the C input features, so x @ W1^T == adj * colsum(W1^T).  Pure VPU work.
    h1 = jnp.maximum(
        adj[:, :, None] * w1s_ref[...][None, :, :] + b1_ref[...][None, :, :],
        0.0)                                                    # (k, N, H)
    h1 = h1.reshape(k * n, hdim)                                # collapse leading dims

    # Layer 2 (MXU, 128x128) + ReLU.
    h2 = jnp.maximum(
        jnp.dot(h1, w2t_ref[...], preferred_element_type=jnp.float32)
        + b2_ref[...], 0.0)                                     # (k*N, H)

    # Layer 3 (MXU) into the lane-dense padded width + sigmoid.
    o = jnp.dot(h2, w3p_ref[...], preferred_element_type=jnp.float32) + b3p_ref[...]
    out_ref[...] = jax.nn.sigmoid(o)                            # (k*N, 128)


def _pick_row_tile(n, target_rows=2048):
    """Largest divisor t of n (multiple of 8, or == n) with t*n <= target_rows."""
    candidates = [t for t in range(1, n + 1)
                  if n % t == 0 and (t == n or t % 8 == 0)]
    fitting = [t for t in candidates if t * n <= target_rows]
    if fitting:
        return max(fitting)
    return min(candidates)


def inner_product_decoder(z, params, *, row_tile=None):
    """Pallas implementation of InnerProductDecoder.forward (eval mode)."""
    w1t, b1, w2t, b2, w3t, b3 = params
    N, D = z.shape
    H = w2t.shape[0]
    C = w3t.shape[1]
    CP = ((C + 127) // 128) * 128          # lane-dense padded output width (>= 128)

    if row_tile is None:
        row_tile = _pick_row_tile(N)
    assert N % row_tile == 0, (N, row_tile)

    # Layer-1 collapse precompute: colsum of W1^T over the C input features.
    w1s = jnp.sum(w1t, axis=0, keepdims=True)                   # (1, H)
    # Lane-dense padded final layer (zeros in padded columns; sliced off below).
    w3p = jnp.pad(w3t, ((0, 0), (0, CP - C)))                   # (H, CP)
    b3p = jnp.pad(b3, ((0, 0), (0, CP - C)))                    # (1, CP)

    M = N * N
    rows = row_tile * N                                         # flattened rows / step

    # Explicit VMEM budget (v7x: 64 MiB physical / 32 MiB default scoped).
    f32b = 4
    blk_bytes = (rows * CP + row_tile * D + N * D) * f32b       # pipelined blocks
    resident = (H * H + H * CP + 3 * H + CP) * f32b             # weights/biases
    interm = 3 * rows * H * f32b                                # h1/h2/o live values
    est = 2 * blk_bytes + 2 * resident + interm
    vmem_limit = int(min(32 * 1024 * 1024, max(4 * 1024 * 1024, 2 * est)))

    out_padded = pl.pallas_call(
        fused_decoder_kernel,
        out_shape=jax.ShapeDtypeStruct((M, CP), jnp.float32),
        grid_spec=pltpu.PrefetchScalarGridSpec(
            num_scalar_prefetch=0,
            grid=(N // row_tile,),
            in_specs=[
                pl.BlockSpec((row_tile, D), lambda i: (i, 0)),  # z row block
                pl.BlockSpec((N, D), lambda i: (0, 0)),         # full z (resident)
                pl.BlockSpec((1, H), lambda i: (0, 0)),         # colsum(W1^T)
                pl.BlockSpec((1, H), lambda i: (0, 0)),         # b1
                pl.BlockSpec((H, H), lambda i: (0, 0)),         # W2^T
                pl.BlockSpec((1, H), lambda i: (0, 0)),         # b2
                pl.BlockSpec((H, CP), lambda i: (0, 0)),        # W3^T padded
                pl.BlockSpec((1, CP), lambda i: (0, 0)),        # b3 padded
            ],
            out_specs=pl.BlockSpec((rows, CP), lambda i: (i, 0)),
        ),
        compiler_params=pltpu.CompilerParams(
            dimension_semantics=("parallel",),
            vmem_limit_bytes=vmem_limit),
    )(z, z, w1s, b1, w2t, b2, w3p, b3p)

    return out_padded[:, :C].reshape(N, N, C)


# ------------------------------ pure-JAX reference ------------------------------
def reference_decoder(z, params):
    w1t, b1, w2t, b2, w3t, b3 = params
    adj = jax.nn.sigmoid(z @ z.T)
    x = jnp.repeat(adj[:, :, None], w1t.shape[0], axis=2)
    h = jax.nn.relu(x @ w1t + b1)
    h = jax.nn.relu(h @ w2t + b2)
    o = h @ w3t + b3
    return jax.nn.sigmoid(o)


def init_params(key, num_classes=10, hidden_dim=128):
    """Deterministic synthetic weights for LinearClassifier (glorot-ish scale).
    Stored pre-transposed as (in, out); biases as (1, out)."""
    k1, k2, k3 = jax.random.split(key, 3)
    w1t = jax.random.normal(k1, (num_classes, hidden_dim), jnp.float32) * 0.1
    b1 = jnp.zeros((1, hidden_dim), jnp.float32) + 0.01
    w2t = jax.random.normal(k2, (hidden_dim, hidden_dim), jnp.float32) * 0.1
    b2 = jnp.zeros((1, hidden_dim), jnp.float32) + 0.01
    w3t = jax.random.normal(k3, (hidden_dim, num_classes), jnp.float32) * 0.1
    b3 = jnp.zeros((1, num_classes), jnp.float32) + 0.01
    return (w1t, b1, w2t, b2, w3t, b3)


if __name__ == "__main__":
    N, D, C = 16, 32, 10  # N nodes, D-dim embeddings, C edge classes
    key = jax.random.PRNGKey(0)
    kz, kp = jax.random.split(key)
    z = jax.random.normal(kz, (N, D), jnp.float32)
    params = init_params(kp, num_classes=C, hidden_dim=128)

    out = inner_product_decoder(z, params)
    out = jax.block_until_ready(out)

    ref = reference_decoder(z, params)
    assert out.shape == (N, N, C), out.shape
    err = float(jnp.max(jnp.abs(out - ref)))
    assert err < 1e-4, err

    print("KERNEL_OK")
</pallas_src>

<mosaic_0001>
module attributes {stable_mosaic.version = 11 : i64} {
  func.func @fused_decoder_kernel(%arg0: i32, %arg1: memref<16x32xf32, #tpu.memory_space<vmem>>, %arg2: memref<16x32xf32, #tpu.memory_space<vmem>>, %arg3: memref<1x128xf32, #tpu.memory_space<vmem>>, %arg4: memref<1x128xf32, #tpu.memory_space<vmem>>, %arg5: memref<128x128xf32, #tpu.memory_space<vmem>>, %arg6: memref<1x128xf32, #tpu.memory_space<vmem>>, %arg7: memref<128x128xf32, #tpu.memory_space<vmem>>, %arg8: memref<1x128xf32, #tpu.memory_space<vmem>>, %arg9: memref<256x128xf32, #tpu.memory_space<vmem>>) attributes {dimension_semantics = [#tpu.dimension_semantics<parallel>], iteration_bounds = array<i64: 1>, scalar_prefetch = 0 : i64, scratch_operands = 0 : i64, tpu.core_type = #tpu.core_type<tc>, window_params = [{transform_indices = @transform_0, window_bounds = array<i64: 16, 32>}, {pipeline_mode = #tpu.pipeline_mode<synchronous>, transform_indices = @transform_1, window_bounds = array<i64: 16, 32>}, {pipeline_mode = #tpu.pipeline_mode<synchronous>, transform_indices = @transform_2, window_bounds = array<i64: 1, 128>}, {pipeline_mode = #tpu.pipeline_mode<synchronous>, transform_indices = @transform_3, window_bounds = array<i64: 1, 128>}, {pipeline_mode = #tpu.pipeline_mode<synchronous>, transform_indices = @transform_4, window_bounds = array<i64: 128, 128>}, {pipeline_mode = #tpu.pipeline_mode<synchronous>, transform_indices = @transform_5, window_bounds = array<i64: 1, 128>}, {pipeline_mode = #tpu.pipeline_mode<synchronous>, transform_indices = @transform_6, window_bounds = array<i64: 128, 128>}, {pipeline_mode = #tpu.pipeline_mode<synchronous>, transform_indices = @transform_7, window_bounds = array<i64: 1, 128>}, {transform_indices = @transform_8, window_bounds = array<i64: 256, 128>}]} {
    %c0 = arith.constant 0 : index
    %c0_0 = arith.constant 0 : index
    %0 = vector.load %arg1[%c0, %c0_0] : memref<16x32xf32, #tpu.memory_space<vmem>>, vector<16x32xf32>
    %c0_1 = arith.constant 0 : index
    %c0_2 = arith.constant 0 : index
    %1 = vector.load %arg2[%c0_1, %c0_2] : memref<16x32xf32, #tpu.memory_space<vmem>>, vector<16x32xf32>
    %cst = arith.constant dense<0.000000e+00> : vector<16x16xf32>
    %2 = tpu.matmul %0, %1, %cst {dimension_numbers = #tpu.dot_dimension_numbers<[1], [1], [0], [0], [0, 0, 1, 0], [], []>} : vector<16x32xf32>, vector<16x32xf32>, vector<16x16xf32> -> vector<16x16xf32>
    %3 = arith.negf %2 : vector<16x16xf32>
    %4 = math.exp %3 : vector<16x16xf32>
    %cst_3 = arith.constant 1.000000e+00 : f32
    %5 = vector.broadcast %cst_3 : f32 to vector<16x16xf32>
    %6 = arith.addf %5, %4 : vector<16x16xf32>
    %7 = arith.divf %5, %6 : vector<16x16xf32>
    %8 = vector.shape_cast %7 : vector<16x16xf32> to vector<16x16x1xf32>
    %c0_4 = arith.constant 0 : index
    %c0_5 = arith.constant 0 : index
    %9 = vector.load %arg3[%c0_4, %c0_5] : memref<1x128xf32, #tpu.memory_space<vmem>>, vector<1x128xf32>
    %10 = vector.shape_cast %9 : vector<1x128xf32> to vector<1x1x128xf32>
    %11 = vector.broadcast %8 : vector<16x16x1xf32> to vector<16x16x128xf32>
    %12 = vector.broadcast %10 : vector<1x1x128xf32> to vector<16x16x128xf32>
    %13 = arith.mulf %11, %12 : vector<16x16x128xf32>
    %c0_6 = arith.constant 0 : index
    %c0_7 = arith.constant 0 : index
    %14 = vector.load %arg4[%c0_6, %c0_7] : memref<1x128xf32, #tpu.memory_space<vmem>>, vector<1x128xf32>
    %15 = vector.shape_cast %14 : vector<1x128xf32> to vector<1x1x128xf32>
    %16 = vector.broadcast %15 : vector<1x1x128xf32> to vector<16x16x128xf32>
    %17 = arith.addf %13, %16 : vector<16x16x128xf32>
    %cst_8 = arith.constant 0.000000e+00 : f32
    %18 = vector.broadcast %cst_8 : f32 to vector<16x16x128xf32>
    %19 = arith.maximumf %17, %18 : vector<16x16x128xf32>
    %20 = vector.shape_cast %19 : vector<16x16x128xf32> to vector<256x128xf32>
    %c0_9 = arith.constant 0 : index
    %c0_10 = arith.constant 0 : index
    %21 = vector.load %arg5[%c0_9, %c0_10] : memref<128x128xf32, #tpu.memory_space<vmem>>, vector<128x128xf32>
    %cst_11 = arith.constant dense<0.000000e+00> : vector<256x128xf32>
    %22 = tpu.matmul %20, %21, %cst_11 {dimension_numbers = #tpu.dot_dimension_numbers<[1], [0], [0], [1], [0, 0, 1, 1], [], []>} : vector<256x128xf32>, vector<128x128xf32>, vector<256x128xf32> -> vector<256x128xf32>
    %c0_12 = arith.constant 0 : index
    %c0_13 = arith.constant 0 : index
    %23 = vector.load %arg6[%c0_12, %c0_13] : memref<1x128xf32, #tpu.memory_space<vmem>>, vector<1x128xf32>
    %24 = vector.broadcast %23 : vector<1x128xf32> to vector<256x128xf32>
    %25 = arith.addf %22, %24 : vector<256x128xf32>
    %cst_14 = arith.constant 0.000000e+00 : f32
    %26 = vector.broadcast %cst_14 : f32 to vector<256x128xf32>
    %27 = arith.maximumf %25, %26 : vector<256x128xf32>
    %c0_15 = arith.constant 0 : index
    %c0_16 = arith.constant 0 : index
    %28 = vector.load %arg7[%c0_15, %c0_16] : memref<128x128xf32, #tpu.memory_space<vmem>>, vector<128x128xf32>
    %cst_17 = arith.constant dense<0.000000e+00> : vector<256x128xf32>
    %29 = tpu.matmul %27, %28, %cst_17 {dimension_numbers = #tpu.dot_dimension_numbers<[1], [0], [0], [1], [0, 0, 1, 1], [], []>} : vector<256x128xf32>, vector<128x128xf32>, vector<256x128xf32> -> vector<256x128xf32>
    %c0_18 = arith.constant 0 : index
    %c0_19 = arith.constant 0 : index
    %30 = vector.load %arg8[%c0_18, %c0_19] : memref<1x128xf32, #tpu.memory_space<vmem>>, vector<1x128xf32>
    %31 = vector.broadcast %30 : vector<1x128xf32> to vector<256x128xf32>
    %32 = arith.addf %29, %31 : vector<256x128xf32>
    %33 = arith.negf %32 : vector<256x128xf32>
    %34 = math.exp %33 : vector<256x128xf32>
    %cst_20 = arith.constant 1.000000e+00 : f32
    %35 = vector.broadcast %cst_20 : f32 to vector<256x128xf32>
    %36 = arith.addf %35, %34 : vector<256x128xf32>
    %37 = arith.divf %35, %36 : vector<256x128xf32>
    %c0_21 = arith.constant 0 : index
    %c0_22 = arith.constant 0 : index
    %38 = vector.load %arg9[%c0_21, %c0_22] : memref<256x128xf32, #tpu.memory_space<vmem>>, vector<256x128xf32>
    tpu.vector_store %arg9[%c0_21, %c0_22], %37 {strides = array<i32>} : memref<256x128xf32, #tpu.memory_space<vmem>>, vector<256x128xf32>,
    return
  }
  func.func @transform_0(%arg0: i32) -> (i32, i32) {
    %c0_i32 = arith.constant 0 : i32
    %c0_i32_0 = arith.constant 0 : i32
    return %arg0, %c0_i32 : i32, i32
  }
  func.func @transform_1(%arg0: i32) -> (i32, i32) {
    %c0_i32 = arith.constant 0 : i32
    %c0_i32_0 = arith.constant 0 : i32
    %c0_i32_1 = arith.constant 0 : i32
    return %c0_i32, %c0_i32_0 : i32, i32
  }
  func.func @transform_2(%arg0: i32) -> (i32, i32) {
    %c0_i32 = arith.constant 0 : i32
    %c0_i32_0 = arith.constant 0 : i32
    %c0_i32_1 = arith.constant 0 : i32
    return %c0_i32, %c0_i32_0 : i32, i32
  }
  func.func @transform_3(%arg0: i32) -> (i32, i32) {
    %c0_i32 = arith.constant 0 : i32
    %c0_i32_0 = arith.constant 0 : i32
    %c0_i32_1 = arith.constant 0 : i32
    return %c0_i32, %c0_i32_0 : i32, i32
  }
  func.func @transform_4(%arg0: i32) -> (i32, i32) {
    %c0_i32 = arith.constant 0 : i32
    %c0_i32_0 = arith.constant 0 : i32
    %c0_i32_1 = arith.constant 0 : i32
    return %c0_i32, %c0_i32_0 : i32, i32
  }
  func.func @transform_5(%arg0: i32) -> (i32, i32) {
    %c0_i32 = arith.constant 0 : i32
    %c0_i32_0 = arith.constant 0 : i32
    %c0_i32_1 = arith.constant 0 : i32
    return %c0_i32, %c0_i32_0 : i32, i32
  }
  func.func @transform_6(%arg0: i32) -> (i32, i32) {
    %c0_i32 = arith.constant 0 : i32
    %c0_i32_0 = arith.constant 0 : i32
    %c0_i32_1 = arith.constant 0 : i32
    return %c0_i32, %c0_i32_0 : i32, i32
  }
  func.func @transform_7(%arg0: i32) -> (i32, i32) {
    %c0_i32 = arith.constant 0 : i32
    %c0_i32_0 = arith.constant 0 : i32
    %c0_i32_1 = arith.constant 0 : i32
    return %c0_i32, %c0_i32_0 : i32, i32
  }
  func.func @transform_8(%arg0: i32) -> (i32, i32) {
    %c0_i32 = arith.constant 0 : i32
    %c0_i32_0 = arith.constant 0 : i32
    return %arg0, %c0_i32 : i32, i32
  }
}

</mosaic_0001>

<llo_original>
// kernel: tpu_custom_call.1
$region0: #{tpu_custom_call.1}
  #allocation0 [shape = 'u32[]', space=smem, size = 0x4, offset = 0x4, fixed_abs, tag = 'smem constant byte address 0x4 - core index']
  #allocation1 [shape = 'u32[72,128]{1,0:T(1,128)}', space=vmem, size = 0x9000, scoped, tag = 'internal scratch']
  %s0 = inlined_call_operand.hbm [shape: f32[16,32], index: 0, kind: input, shape index: {}]
  %s1 = inlined_call_operand.hbm [shape: f32[16,32], index: 1, kind: input, shape index: {}]
  %s2 = inlined_call_operand.vmem [shape: f32[1,128], index: 2, kind: input, shape index: {}]
  %s3 = inlined_call_operand.vmem [shape: f32[1,128], index: 3, kind: input, shape index: {}]
  %s4 = inlined_call_operand.hbm [shape: f32[128,128], index: 4, kind: input, shape index: {}]
  %s5 = inlined_call_operand.vmem [shape: f32[1,128], index: 5, kind: input, shape index: {}]
  %s6 = inlined_call_operand.hbm [shape: f32[128,128], index: 6, kind: input, shape index: {}]
  %s7 = inlined_call_operand.vmem [shape: f32[1,128], index: 7, kind: input, shape index: {}]
  %s8 = inlined_call_operand.hbm [shape: f32[256,128], index: 8, kind: output, shape index: {}]
  %s9 = sld [smem:[#allocation0]]
  $region58: #{tpu_custom_call.1} parent=0
    _
  %s11 = ssub.s32 1, %s9
  %s12 = scalar_select 0, %s11, %s9
  $region1: #{tpu_custom_call.1} parent=0
    #allocation2 [shape = 'u8[8192]{0}', space=vmem, size = 0x2000, scoped, tag = 'input window, operand 0, single buffered']
    #allocation3 [shape = 's32[1]{0}', space=sflag, size = 0x4, scoped, tag = 'scoped memory for tpu_custom_call.1']
    #allocation4 [shape = 's32[1]{0}', space=sflag, size = 0x4, scoped, tag = 'scoped memory for tpu_custom_call.1']
    #allocation5 [shape = 'u8[8192]{0}', space=vmem, size = 0x2000, scoped, tag = 'input window, operand 1, single buffered']
    #allocation6 [shape = 's32[1]{0}', space=sflag, size = 0x4, scoped, tag = 'scoped memory for tpu_custom_call.1']
    #allocation7 [shape = 'u8[65536]{0}', space=vmem, size = 0x10000, scoped, tag = 'input window, operand 4, single buffered']
    #allocation8 [shape = 'u8[65536]{0}', space=vmem, size = 0x10000, scoped, tag = 'input window, operand 6, single buffered']
    #allocation9 [shape = 's32[1]{0}', space=sflag, size = 0x4, scoped, tag = 'scoped memory for tpu_custom_call.1']
    #allocation10 [shape = 'u8[131072]{0}', space=vmem, size = 0x20000, scoped, tag = 'output window, operand 0, single buffered']
    %13 = vsyncpa [#allocation3], 0
    %14 = vsyncpa [#allocation6], 0
    %15 = vsyncpa [#allocation9], 0
    %16 = vsyncpa [#allocation4], 0
    // Predicated region
    $region2: #{tpu_custom_call.1} parent=1 // pred_check
      _
    $region3: #{tpu_custom_call.1} parent=1 // pred_check_branch
      %18 = sbr.rel (0) target = $region5
    $region4: #{tpu_custom_call.1} parent=1 // pred_region
      %20 = vsyncadd [#allocation3], 0
      %s21 = sshll.u32 %s0, 4
      %s22 = int_to_ptr.hbm [resolvable:$true] %s21
      %s23 = sshll.u32 [#allocation2], 4
      %s24 = int_to_ptr.vmem [resolvable:$true] %s23
      %29 = dma.hbm_to_vmem [thread:$0]  %s22, 256, %s24, [#allocation3], 128, 128, 8
    $region5: #{tpu_custom_call.1} parent=1 // pred_fallthru
      _
    // Predicated region
    $region6: #{tpu_custom_call.1} parent=1 // pred_check
      _
    $region7: #{tpu_custom_call.1} parent=1 // pred_check_branch
      %31 = sbr.rel (0) target = $region9
    $region8: #{tpu_custom_call.1} parent=1 // pred_region
      %33 = vsyncadd [#allocation6], 0
      %s34 = sshll.u32 %s1, 4
      %s35 = int_to_ptr.hbm [resolvable:$true] %s34
      %s36 = sshll.u32 [#allocation5], 4
      %s37 = int_to_ptr.vmem [resolvable:$true] %s36
      %42 = dma.hbm_to_vmem [thread:$0]  %s35, 256, %s37, [#allocation6], 128, 128, 8
    $region9: #{tpu_custom_call.1} parent=1 // pred_fallthru
      _
    // Predicated region
    $region10: #{tpu_custom_call.1} parent=1 // pred_check
      _
    $region11: #{tpu_custom_call.1} parent=1 // pred_check_branch
      %44 = sbr.rel (0) target = $region13
    $region12: #{tpu_custom_call.1} parent=1 // pred_region
      _
    $region13: #{tpu_custom_call.1} parent=1 // pred_fallthru
      _
    // Predicated region
    $region14: #{tpu_custom_call.1} parent=1 // pred_check
      _
    $region15: #{tpu_custom_call.1} parent=1 // pred_check_branch
      %46 = sbr.rel (0) target = $region17
    $region16: #{tpu_custom_call.1} parent=1 // pred_region
      _
    $region17: #{tpu_custom_call.1} parent=1 // pred_fallthru
      _
    // Predicated region
    $region18: #{tpu_custom_call.1} parent=1 // pred_check
      _
    $region19: #{tpu_custom_call.1} parent=1 // pred_check_branch
      %48 = sbr.rel (0) target = $region21
    $region20: #{tpu_custom_call.1} parent=1 // pred_region
      %50 = vsyncadd [#allocation6], 0
      %s51 = sshll.u32 %s4, 4
      %s52 = int_to_ptr.hbm [resolvable:$true] %s51
      %s53 = sshll.u32 [#allocation7], 4
      %s54 = int_to_ptr.vmem [resolvable:$true] %s53
      %59 = dma.hbm_to_vmem [thread:$0]  %s52, 2048, %s54, [#allocation6], 128, 128, 8
    $region21: #{tpu_custom_call.1} parent=1 // pred_fallthru
      _
    // Predicated region
    $region22: #{tpu_custom_call.1} parent=1 // pred_check
      _
    $region23: #{tpu_custom_call.1} parent=1 // pred_check_branch
      %61 = sbr.rel (0) target = $region25
    $region24: #{tpu_custom_call.1} parent=1 // pred_region
      _
    $region25: #{tpu_custom_call.1} parent=1 // pred_fallthru
      _
    // Predicated region
    $region26: #{tpu_custom_call.1} parent=1 // pred_check
      _
    $region27: #{tpu_custom_call.1} parent=1 // pred_check_branch
      %63 = sbr.rel (0) target = $region29
    $region28: #{tpu_custom_call.1} parent=1 // pred_region
      %65 = vsyncadd [#allocation9], 0
      %s66 = sshll.u32 %s6, 4
      %s67 = int_to_ptr.hbm [resolvable:$true] %s66
      %s68 = sshll.u32 [#allocation8], 4
      %s69 = int_to_ptr.vmem [resolvable:$true] %s68
      %74 = dma.hbm_to_vmem [thread:$0]  %s67, 2048, %s69, [#allocation9], 128, 128, 8
    $region29: #{tpu_custom_call.1} parent=1 // pred_fallthru
      _
    // Predicated region
    $region30: #{tpu_custom_call.1} parent=1 // pred_check
      _
    $region31: #{tpu_custom_call.1} parent=1 // pred_check_branch
      %76 = sbr.rel (0) target = $region33
    $region32: #{tpu_custom_call.1} parent=1 // pred_region
      _
    $region33: #{tpu_custom_call.1} parent=1 // pred_fallthru
      _
    // Predicated region
    $region34: #{tpu_custom_call.1} parent=1 // pred_check
      _
    $region35: #{tpu_custom_call.1} parent=1 // pred_check_branch
      %78 = sbr.rel (0) target = $region37
    $region36: #{tpu_custom_call.1} parent=1 // pred_region
      %80 = dma.done [#allocation3], 256
    $region37: #{tpu_custom_call.1} parent=1 // pred_fallthru
      _
    // Predicated region
    $region38: #{tpu_custom_call.1} parent=1 // pred_check
      _
    $region39: #{tpu_custom_call.1} parent=1 // pred_check_branch
      %82 = sbr.rel (0) target = $region41
    $region40: #{tpu_custom_call.1} parent=1 // pred_region
      %84 = dma.done [#allocation6], 256
    $region41: #{tpu_custom_call.1} parent=1 // pred_fallthru
      _
    // Predicated region
    $region42: #{tpu_custom_call.1} parent=1 // pred_check
      _
    $region43: #{tpu_custom_call.1} parent=1 // pred_check_branch
      %86 = sbr.rel (0) target = $region45
    $region44: #{tpu_custom_call.1} parent=1 // pred_region
      %88 = dma.done [#allocation6], 2048
    $region45: #{tpu_custom_call.1} parent=1 // pred_fallthru
      _
    // Predicated region
    $region46: #{tpu_custom_call.1} parent=1 // pred_check
      _
    $region47: #{tpu_custom_call.1} parent=1 // pred_check_branch
      %90 = sbr.rel (0) target = $region49
    $region48: #{tpu_custom_call.1} parent=1 // pred_region
      %92 = dma.done [#allocation9], 2048
    $region49: #{tpu_custom_call.1} parent=1 // pred_fallthru
      _
    %v93 = vld [vmem:[#allocation2] sm:$0xff]
    %v94 = vld [vmem:[#allocation2 + $0x8] sm:$0xff]
    %v95 = vld [vmem:[#allocation5] sm:$0xff]
    %v96 = vld [vmem:[#allocation5 + $0x8] sm:$0xff]
    %vm97 = vcmask 261120
    %v99 = vsel %vm97, %v93, 0
    %v102 = vsel %vm97, %v94, 0
    %v105 = vsel %vm97, %v95, 0
    %v108 = vsel %vm97, %v96, 0
    %110 = vmatpush.xpose.msra.mxu0 0.0
    %111 = vmatpush.xpose.msra.mxu0 0.0
    %112 = vmatpush.xpose.msra.mxu0 0.0
    %113 = vmatpush.xpose.msra.mxu0 0.0
    %114 = vmatpush.xpose.msra.mxu0 0.0
    %115 = vmatpush.xpose.msra.mxu0 0.0
    %116 = vmatpush.xpose.msra.mxu0 0.0
    %117 = vmatpush.xpose.msra.mxu0 0.0
    %118 = vmatpush.xpose.msra.mxu0 0.0
    %119 = vmatpush.xpose.msra.mxu0 0.0
    %120 = vmatpush.xpose.msra.mxu0 0.0
    %121 = vmatpush.xpose.msra.mxu0 0.0
    %122 = vmatpush.xpose.msra.mxu0 0.0
    %123 = vmatpush.xpose.msra.mxu0 0.0
    %124 = vmatpush.xpose.msra.mxu0 %v108
    %125 = vmatpush.xpose.msra.mxu0 %v105
    %126 = vmatmul.f32.gmra.mxu0 %v99
    %v127 = vpop.f32.mrf.mxu0
    %v128 = vadd.f32 0.0, %v127
    %129 = vmatmul.f32.gmra.mxu0 %v102
    %v130 = vpop.f32.mrf.mxu0
    %v131 = vadd.f32 0.0, %v130
    %132 = vdwg.mxu0
    %v133 = vxor.u32 %v128, 2147483648
    %v134 = vxor.u32 %v131, 2147483648
    %v135 = vmul.f32 %v133, 1.442695
    %v136 = vpow.pop %v135
    %v137 = vmul.f32 %v134, 1.442695
    %v138 = vpow.pop %v137
    %v139 = vadd.f32 %v136, 1.0
    %v140 = vadd.f32 %v138, 1.0
    %v141 = vrcp.pop %v139
    %v142 = vmul.f32 %v139, %v141
    %v143 = vsub.f32 1.0, %v142
    %v144 = vmul.f32 %v141, %v143
    %v145 = vadd.f32 %v141, %v144
    %vm146 = vweird.f32 %v139
    %vm147 = vweird.f32 %v141
    %vm148 = vmor %vm146, %vm147
    %v149 = vsel %vm148, %v141, %v145
    %v150 = vand.u32 2147483647, %v139
    %vm151 = vcmp.eq.f32.partialorder %v150, 8.507059e+37
    %v152 = vand.u32 %v139, 2147483648
    %v153 = vor.u32 1.1754944e-38, %v152
    %v154 = vsel %vm151, %v153, %v149
    %v155 = vmul.f32 1.0, %v154
    %v156 = vrcp.pop %v140
    %v157 = vmul.f32 %v140, %v156
    %v158 = vsub.f32 1.0, %v157
    %v159 = vmul.f32 %v156, %v158
    %v160 = vadd.f32 %v156, %v159
    %vm161 = vweird.f32 %v140
    %vm162 = vweird.f32 %v156
    %vm163 = vmor %vm161, %vm162
    %v164 = vsel %vm163, %v156, %v160
    %v165 = vand.u32 2147483647, %v140
    %vm166 = vcmp.eq.f32.partialorder %v165, 8.507059e+37
    %v167 = vand.u32 %v140, 2147483648
    %v168 = vor.u32 1.1754944e-38, %v167
    %v169 = vsel %vm166, %v168, %v164
    %v170 = vmul.f32 1.0, %v169
    %v171 = vperm.slane %v155, 0
    %v172 = vlaneseq
    %v173 = vshrl.u32 %v172, 7
    %175 = vset.pattern.permute.xlu0 %v173
    %176 = vperm.xlu0 %175, %v171
    %v177 = vpop.permute.xlu0 %176
    %v178 = vlaneseq
    %v179 = vshrl.u32 %v178, 7
    %v180 = vadd.s32 %v179, 8
    %181 = vset.pattern.permute.xlu0 %v180
    %182 = vperm.xlu0 %181, %v171
    %v183 = vpop.permute.xlu0 %182
    %v184 = vperm.slane %v155, 1
    %v185 = vlaneseq
    %v186 = vshrl.u32 %v185, 7
    %188 = vset.pattern.permute.xlu0 %v186
    %189 = vperm.xlu0 %188, %v184
    %v190 = vpop.permute.xlu0 %189
    %v191 = vlaneseq
    %v192 = vshrl.u32 %v191, 7
    %v193 = vadd.s32 %v192, 8
    %194 = vset.pattern.permute.xlu0 %v193
    %195 = vperm.xlu0 %194, %v184
    %v196 = vpop.permute.xlu0 %195
    %v197 = vperm.slane %v155, 2
    %v198 = vlaneseq
    %v199 = vshrl.u32 %v198, 7
    %201 = vset.pattern.permute.xlu0 %v199
    %202 = vperm.xlu0 %201, %v197
    %v203 = vpop.permute.xlu0 %202
    %v204 = vlaneseq
    %v205 = vshrl.u32 %v204, 7
    %v206 = vadd.s32 %v205, 8
    %207 = vset.pattern.permute.xlu0 %v206
    %208 = vperm.xlu0 %207, %v197
    %v209 = vpop.permute.xlu0 %208
    %v210 = vperm.slane %v155, 3
    %v211 = vlaneseq
    %v212 = vshrl.u32 %v211, 7
    %214 = vset.pattern.permute.xlu0 %v212
    %215 = vperm.xlu0 %214, %v210
    %v216 = vpop.permute.xlu0 %215
    %v217 = vlaneseq
    %v218 = vshrl.u32 %v217, 7
    %v219 = vadd.s32 %v218, 8
    %220 = vset.pattern.permute.xlu0 %v219
    %221 = vperm.xlu0 %220, %v210
    %v222 = vpop.permute.xlu0 %221
    %v223 = vperm.slane %v155, 4
    %v224 = vlaneseq
    %v225 = vshrl.u32 %v224, 7
    %227 = vset.pattern.permute.xlu0 %v225
    %228 = vperm.xlu0 %227, %v223
    %v229 = vpop.permute.xlu0 %228
    %v230 = vlaneseq
    %v231 = vshrl.u32 %v230, 7
    %v232 = vadd.s32 %v231, 8
    %233 = vset.pattern.permute.xlu0 %v232
    %234 = vperm.xlu0 %233, %v223
    %v235 = vpop.permute.xlu0 %234
    %v236 = vperm.slane %v155, 5
    %v237 = vlaneseq
    %v238 = vshrl.u32 %v237, 7
    %240 = vset.pattern.permute.xlu0 %v238
    %241 = vperm.xlu0 %240, %v236
    %v242 = vpop.permute.xlu0 %241
    %v243 = vlaneseq
    %v244 = vshrl.u32 %v243, 7
    %v245 = vadd.s32 %v244, 8
    %246 = vset.pattern.permute.xlu0 %v245
    %247 = vperm.xlu0 %246, %v236
    %v248 = vpop.permute.xlu0 %247
    %v249 = vperm.slane %v155, 6
    %v250 = vlaneseq
    %v251 = vshrl.u32 %v250, 7
    %253 = vset.pattern.permute.xlu0 %v251
    %254 = vperm.xlu0 %253, %v249
    %v255 = vpop.permute.xlu0 %254
    %v256 = vlaneseq
    %v257 = vshrl.u32 %v256, 7
    %v258 = vadd.s32 %v257, 8
    %259 = vset.pattern.permute.xlu0 %v258
    %260 = vperm.xlu0 %259, %v249
    %v261 = vpop.permute.xlu0 %260
    %v262 = vperm.slane %v155, 7
    %v263 = vlaneseq
    %v264 = vshrl.u32 %v263, 7
    %266 = vset.pattern.permute.xlu0 %v264
    %267 = vperm.xlu0 %266, %v262
    %v268 = vpop.permute.xlu0 %267
    %v269 = vlaneseq
    %v270 = vshrl.u32 %v269, 7
    %v271 = vadd.s32 %v270, 8
    %272 = vset.pattern.permute.xlu0 %v271
    %273 = vperm.xlu0 %272, %v262
    %v274 = vpop.permute.xlu0 %273
    %v275 = vperm.slane %v170, 0
    %v276 = vlaneseq
    %v277 = vshrl.u32 %v276, 7
    %279 = vset.pattern.permute.xlu0 %v277
    %280 = vperm.xlu0 %279, %v275
    %v281 = vpop.permute.xlu0 %280
    %v282 = vlaneseq
    %v283 = vshrl.u32 %v282, 7
    %v284 = vadd.s32 %v283, 8
    %285 = vset.pattern.permute.xlu0 %v284
    %286 = vperm.xlu0 %285, %v275
    %v287 = vpop.permute.xlu0 %286
    %v288 = vperm.slane %v170, 1
    %v289 = vlaneseq
    %v290 = vshrl.u32 %v289, 7
    %292 = vset.pattern.permute.xlu0 %v290
    %293 = vperm.xlu0 %292, %v288
    %v294 = vpop.permute.xlu0 %293
    %v295 = vlaneseq
    %v296 = vshrl.u32 %v295, 7
    %v297 = vadd.s32 %v296, 8
    %298 = vset.pattern.permute.xlu0 %v297
    %299 = vperm.xlu0 %298, %v288
    %v300 = vpop.permute.xlu0 %299
    %v301 = vperm.slane %v170, 2
    %v302 = vlaneseq
    %v303 = vshrl.u32 %v302, 7
    %305 = vset.pattern.permute.xlu0 %v303
    %306 = vperm.xlu0 %305, %v301
    %v307 = vpop.permute.xlu0 %306
    %v308 = vlaneseq
    %v309 = vshrl.u32 %v308, 7
    %v310 = vadd.s32 %v309, 8
    %311 = vset.pattern.permute.xlu0 %v310
    %312 = vperm.xlu0 %311, %v301
    %v313 = vpop.permute.xlu0 %312
    %v314 = vperm.slane %v170, 3
    %v315 = vlaneseq
    %v316 = vshrl.u32 %v315, 7
    %318 = vset.pattern.permute.xlu0 %v316
    %319 = vperm.xlu0 %318, %v314
    %v320 = vpop.permute.xlu0 %319
    %v321 = vlaneseq
    %v322 = vshrl.u32 %v321, 7
    %v323 = vadd.s32 %v322, 8
    %324 = vset.pattern.permute.xlu0 %v323
    %325 = vperm.xlu0 %324, %v314
    %v326 = vpop.permute.xlu0 %325
    %v327 = vperm.slane %v170, 4
    %v328 = vlaneseq
    %v329 = vshrl.u32 %v328, 7
    %331 = vset.pattern.permute.xlu0 %v329
    %332 = vperm.xlu0 %331, %v327
    %v333 = vpop.permute.xlu0 %332
    %v334 = vlaneseq
    %v335 = vshrl.u32 %v334, 7
    %v336 = vadd.s32 %v335, 8
    %337 = vset.pattern.permute.xlu0 %v336
    %338 = vperm.xlu0 %337, %v327
    %v339 = vpop.permute.xlu0 %338
    %v340 = vperm.slane %v170, 5
    %v341 = vlaneseq
    %v342 = vshrl.u32 %v341, 7
    %344 = vset.pattern.permute.xlu0 %v342
    %345 = vperm.xlu0 %344, %v340
    %v346 = vpop.permute.xlu0 %345
    %v347 = vlaneseq
    %v348 = vshrl.u32 %v347, 7
    %v349 = vadd.s32 %v348, 8
    %350 = vset.pattern.permute.xlu0 %v349
    %351 = vperm.xlu0 %350, %v340
    %v352 = vpop.permute.xlu0 %351
    %v353 = vperm.slane %v170, 6
    %v354 = vlaneseq
    %v355 = vshrl.u32 %v354, 7
    %357 = vset.pattern.permute.xlu0 %v355
    %358 = vperm.xlu0 %357, %v353
    %v359 = vpop.permute.xlu0 %358
    %v360 = vlaneseq
    %v361 = vshrl.u32 %v360, 7
    %v362 = vadd.s32 %v361, 8
    %363 = vset.pattern.permute.xlu0 %v362
    %364 = vperm.xlu0 %363, %v353
    %v365 = vpop.permute.xlu0 %364
    %v366 = vperm.slane %v170, 7
    %v367 = vlaneseq
    %v368 = vshrl.u32 %v367, 7
    %370 = vset.pattern.permute.xlu0 %v368
    %371 = vperm.xlu0 %370, %v366
    %v372 = vpop.permute.xlu0 %371
    %v373 = vlaneseq
    %v374 = vshrl.u32 %v373, 7
    %v375 = vadd.s32 %v374, 8
    %376 = vset.pattern.permute.xlu0 %v375
    %377 = vperm.xlu0 %376, %v366
    %v378 = vpop.permute.xlu0 %377
    %v379 = vld [vmem:[%s2] sm:$0x1]
    %v381 = vperm.slane %v379, 0
    %v383 = vmul.f32 %v177, %v381
    %v384 = vmul.f32 %v183, %v381
    %v385 = vmul.f32 %v190, %v381
    %v386 = vmul.f32 %v196, %v381
    %v387 = vmul.f32 %v203, %v381
    %v388 = vmul.f32 %v209, %v381
    %v389 = vmul.f32 %v216, %v381
    %v390 = vmul.f32 %v222, %v381
    %v391 = vmul.f32 %v229, %v381
    %v392 = vmul.f32 %v235, %v381
    %v393 = vmul.f32 %v242, %v381
    %v394 = vmul.f32 %v248, %v381
    %v395 = vmul.f32 %v255, %v381
    %v396 = vmul.f32 %v261, %v381
    %v397 = vmul.f32 %v268, %v381
    %v398 = vmul.f32 %v274, %v381
    %v399 = vmul.f32 %v281, %v381
    %v400 = vmul.f32 %v287, %v381
    %v401 = vmul.f32 %v294, %v381
    %v402 = vmul.f32 %v300, %v381
    %v403 = vmul.f32 %v307, %v381
    %v404 = vmul.f32 %v313, %v381
    %v405 = vmul.f32 %v320, %v381
    %v406 = vmul.f32 %v326, %v381
    %v407 = vmul.f32 %v333, %v381
    %v408 = vmul.f32 %v339, %v381
    %v409 = vmul.f32 %v346, %v381
    %v410 = vmul.f32 %v352, %v381
    %v411 = vmul.f32 %v359, %v381
    %v412 = vmul.f32 %v365, %v381
    %v413 = vmul.f32 %v372, %v381
    %v414 = vmul.f32 %v378, %v381
    %v415 = vld [vmem:[%s3] sm:$0x1]
    %v417 = vperm.slane %v415, 0
    %v419 = vadd.f32 %v383, %v417
    %v420 = vadd.f32 %v384, %v417
    %v421 = vadd.f32 %v385, %v417
    %v422 = vadd.f32 %v386, %v417
    %v423 = vadd.f32 %v387, %v417
    %v424 = vadd.f32 %v388, %v417
    %v425 = vadd.f32 %v389, %v417
    %v426 = vadd.f32 %v390, %v417
    %v427 = vadd.f32 %v391, %v417
    %v428 = vadd.f32 %v392, %v417
    %v429 = vadd.f32 %v393, %v417
    %v430 = vadd.f32 %v394, %v417
    %v431 = vadd.f32 %v395, %v417
    %v432 = vadd.f32 %v396, %v417
    %v433 = vadd.f32 %v397, %v417
    %v434 = vadd.f32 %v398, %v417
    %v435 = vadd.f32 %v399, %v417
    %v436 = vadd.f32 %v400, %v417
    %v437 = vadd.f32 %v401, %v417
    %v438 = vadd.f32 %v402, %v417
    %v439 = vadd.f32 %v403, %v417
    %v440 = vadd.f32 %v404, %v417
    %v441 = vadd.f32 %v405, %v417
    %v442 = vadd.f32 %v406, %v417
    %v443 = vadd.f32 %v407, %v417
    %v444 = vadd.f32 %v408, %v417
    %v445 = vadd.f32 %v409, %v417
    %v446 = vadd.f32 %v410, %v417
    %v447 = vadd.f32 %v411, %v417
    %v448 = vadd.f32 %v412, %v417
    %v449 = vadd.f32 %v413, %v417
    %v450 = vadd.f32 %v414, %v417
    %v451 = vmax.f32 %v419, 0.0
    %v452 = vmax.f32 %v420, 0.0
    %v453 = vmax.f32 %v421, 0.0
    %v454 = vmax.f32 %v422, 0.0
    %v455 = vmax.f32 %v423, 0.0
    %v456 = vmax.f32 %v424, 0.0
    %v457 = vmax.f32 %v425, 0.0
    %v458 = vmax.f32 %v426, 0.0
    %v459 = vmax.f32 %v427, 0.0
    %v460 = vmax.f32 %v428, 0.0
    %v461 = vmax.f32 %v429, 0.0
    %v462 = vmax.f32 %v430, 0.0
    %v463 = vmax.f32 %v431, 0.0
    %v464 = vmax.f32 %v432, 0.0
    %v465 = vmax.f32 %v433, 0.0
    %v466 = vmax.f32 %v434, 0.0
    %v467 = vmax.f32 %v435, 0.0
    %v468 = vmax.f32 %v436, 0.0
    %v469 = vmax.f32 %v437, 0.0
    %v470 = vmax.f32 %v438, 0.0
    %v471 = vmax.f32 %v439, 0.0
    %v472 = vmax.f32 %v440, 0.0
    %v473 = vmax.f32 %v441, 0.0
    %v474 = vmax.f32 %v442, 0.0
    %v475 = vmax.f32 %v443, 0.0
    %v476 = vmax.f32 %v444, 0.0
    %v477 = vmax.f32 %v445, 0.0
    %v478 = vmax.f32 %v446, 0.0
    %v479 = vmax.f32 %v447, 0.0
    %v480 = vmax.f32 %v448, 0.0
    %v481 = vmax.f32 %v449, 0.0
    %v482 = vmax.f32 %v450, 0.0
    %v483 = vld [vmem:[#allocation7] sm:$0xff]
    %v484 = vld [vmem:[#allocation7 + $0x8] sm:$0xff]
    %v485 = vld [vmem:[#allocation7 + $0x10] sm:$0xff]
    %v486 = vld [vmem:[#allocation7 + $0x18] sm:$0xff]
    %v487 = vld [vmem:[#allocation7 + $0x20] sm:$0xff]
    %v488 = vld [vmem:[#allocation7 + $0x28] sm:$0xff]
    %v489 = vld [vmem:[#allocation7 + $0x30] sm:$0xff]
    %v490 = vld [vmem:[#allocation7 + $0x38] sm:$0xff]
    %v491 = vld [vmem:[#allocation7 + $0x40] sm:$0xff]
    %v492 = vld [vmem:[#allocation7 + $0x48] sm:$0xff]
    %v493 = vld [vmem:[#allocation7 + $0x50] sm:$0xff]
    %v494 = vld [vmem:[#allocation7 + $0x58] sm:$0xff]
    %v495 = vld [vmem:[#allocation7 + $0x60] sm:$0xff]
    %v496 = vld [vmem:[#allocation7 + $0x68] sm:$0xff]
    %v497 = vld [vmem:[#allocation7 + $0x70] sm:$0xff]
    %v498 = vld [vmem:[#allocation7 + $0x78] sm:$0xff]
    %v499 = vld [vmem:[%s5] sm:$0x1]
    %v501 = vperm.slane %v499, 0
    %503 = vmatpush.msra.mxu0 %v498
    %504 = vmatpush.msra.mxu0 %v497
    %505 = vmatpush.msra.mxu0 %v496
    %506 = vmatpush.msra.mxu0 %v495
    %507 = vmatpush.msra.mxu0 %v494
    %508 = vmatpush.msra.mxu0 %v493
    %509 = vmatpush.msra.mxu0 %v492
    %510 = vmatpush.msra.mxu0 %v491
    %511 = vmatpush.msra.mxu0 %v490
    %512 = vmatpush.msra.mxu0 %v489
    %513 = vmatpush.msra.mxu0 %v488
    %514 = vmatpush.msra.mxu0 %v487
    %515 = vmatpush.msra.mxu0 %v486
    %516 = vmatpush.msra.mxu0 %v485
    %517 = vmatpush.msra.mxu0 %v484
    %518 = vmatpush.msra.mxu0 %v483
    %519 = vmatmul.f32.gmra.mxu0 %v451
    %v520 = vpop.f32.mrf.mxu0
    %v521 = vadd.f32 %v501, %v520
    %522 = vmatmul.f32.gmra.mxu0 %v452
    %v523 = vpop.f32.mrf.mxu0
    %v524 = vadd.f32 %v501, %v523
    %525 = vmatmul.f32.gmra.mxu0 %v453
    %v526 = vpop.f32.mrf.mxu0
    %v527 = vadd.f32 %v501, %v526
    %528 = vmatmul.f32.gmra.mxu0 %v454
    %v529 = vpop.f32.mrf.mxu0
    %v530 = vadd.f32 %v501, %v529
    %531 = vmatmul.f32.gmra.mxu0 %v455
    %v532 = vpop.f32.mrf.mxu0
    %v533 = vadd.f32 %v501, %v532
    %534 = vmatmul.f32.gmra.mxu0 %v456
    %v535 = vpop.f32.mrf.mxu0
    %v536 = vadd.f32 %v501, %v535
    %537 = vmatmul.f32.gmra.mxu0 %v457
    %v538 = vpop.f32.mrf.mxu0
    %v539 = vadd.f32 %v501, %v538
    %540 = vmatmul.f32.gmra.mxu0 %v458
    %v541 = vpop.f32.mrf.mxu0
    %v542 = vadd.f32 %v501, %v541
    %543 = vmatmul.f32.gmra.mxu0 %v459
    %v544 = vpop.f32.mrf.mxu0
    %v545 = vadd.f32 %v501, %v544
    %546 = vmatmul.f32.gmra.mxu0 %v460
    %v547 = vpop.f32.mrf.mxu0
    %v548 = vadd.f32 %v501, %v547
    %549 = vmatmul.f32.gmra.mxu0 %v461
    %v550 = vpop.f32.mrf.mxu0
    %v551 = vadd.f32 %v501, %v550
    %552 = vmatmul.f32.gmra.mxu0 %v462
    %v553 = vpop.f32.mrf.mxu0
    %v554 = vadd.f32 %v501, %v553
    %555 = vmatmul.f32.gmra.mxu0 %v463
    %v556 = vpop.f32.mrf.mxu0
    %v557 = vadd.f32 %v501, %v556
    %558 = vmatmul.f32.gmra.mxu0 %v464
    %v559 = vpop.f32.mrf.mxu0
    %v560 = vadd.f32 %v501, %v559
    %561 = vmatmul.f32.gmra.mxu0 %v465
    %v562 = vpop.f32.mrf.mxu0
    %v563 = vadd.f32 %v501, %v562
    %564 = vmatmul.f32.gmra.mxu0 %v466
    %v565 = vpop.f32.mrf.mxu0
    %v566 = vadd.f32 %v501, %v565
    %567 = vmatmul.f32.gmra.mxu0 %v467
    %v568 = vpop.f32.mrf.mxu0
    %v569 = vadd.f32 %v501, %v568
    %570 = vmatmul.f32.gmra.mxu0 %v468
    %v571 = vpop.f32.mrf.mxu0
    %v572 = vadd.f32 %v501, %v571
    %573 = vmatmul.f32.gmra.mxu0 %v469
    %v574 = vpop.f32.mrf.mxu0
    %v575 = vadd.f32 %v501, %v574
    %576 = vmatmul.f32.gmra.mxu0 %v470
    %v577 = vpop.f32.mrf.mxu0
    %v578 = vadd.f32 %v501, %v577
    %579 = vmatmul.f32.gmra.mxu0 %v471
    %v580 = vpop.f32.mrf.mxu0
    %v581 = vadd.f32 %v501, %v580
    %582 = vmatmul.f32.gmra.mxu0 %v472
    %v583 = vpop.f32.mrf.mxu0
    %v584 = vadd.f32 %v501, %v583
    %585 = vmatmul.f32.gmra.mxu0 %v473
    %v586 = vpop.f32.mrf.mxu0
    %v587 = vadd.f32 %v501, %v586
    %588 = vmatmul.f32.gmra.mxu0 %v474
    %v589 = vpop.f32.mrf.mxu0
    %v590 = vadd.f32 %v501, %v589
    %591 = vmatmul.f32.gmra.mxu0 %v475
    %v592 = vpop.f32.mrf.mxu0
    %v593 = vadd.f32 %v501, %v592
    %594 = vmatmul.f32.gmra.mxu0 %v476
    %v595 = vpop.f32.mrf.mxu0
    %v596 = vadd.f32 %v501, %v595
    %597 = vmatmul.f32.gmra.mxu0 %v477
    %v598 = vpop.f32.mrf.mxu0
    %v599 = vadd.f32 %v501, %v598
    %600 = vmatmul.f32.gmra.mxu0 %v478
    %v601 = vpop.f32.mrf.mxu0
    %v602 = vadd.f32 %v501, %v601
    %603 = vmatmul.f32.gmra.mxu0 %v479
    %v604 = vpop.f32.mrf.mxu0
    %v605 = vadd.f32 %v501, %v604
    %606 = vmatmul.f32.gmra.mxu0 %v480
    %v607 = vpop.f32.mrf.mxu0
    %v608 = vadd.f32 %v501, %v607
    %609 = vmatmul.f32.gmra.mxu0 %v481
    %v610 = vpop.f32.mrf.mxu0
    %v611 = vadd.f32 %v501, %v610
    %612 = vmatmul.f32.gmra.mxu0 %v482
    %v613 = vpop.f32.mrf.mxu0
    %v614 = vadd.f32 %v501, %v613
    %615 = vdwg.mxu0
    %v616 = vmax.f32 %v521, 0.0
    %v617 = vmax.f32 %v524, 0.0
    %v618 = vmax.f32 %v527, 0.0
    %v619 = vmax.f32 %v530, 0.0
    %v620 = vmax.f32 %v533, 0.0
    %v621 = vmax.f32 %v536, 0.0
    %v622 = vmax.f32 %v539, 0.0
    %v623 = vmax.f32 %v542, 0.0
    %v624 = vmax.f32 %v545, 0.0
    %v625 = vmax.f32 %v548, 0.0
    %v626 = vmax.f32 %v551, 0.0
    %v627 = vmax.f32 %v554, 0.0
    %v628 = vmax.f32 %v557, 0.0
    %v629 = vmax.f32 %v560, 0.0
    %v630 = vmax.f32 %v563, 0.0
    %v631 = vmax.f32 %v566, 0.0
    %v632 = vmax.f32 %v569, 0.0
    %v633 = vmax.f32 %v572, 0.0
    %v634 = vmax.f32 %v575, 0.0
    %v635 = vmax.f32 %v578, 0.0
    %v636 = vmax.f32 %v581, 0.0
    %v637 = vmax.f32 %v584, 0.0
    %v638 = vmax.f32 %v587, 0.0
    %v639 = vmax.f32 %v590, 0.0
    %v640 = vmax.f32 %v593, 0.0
    %v641 = vmax.f32 %v596, 0.0
    %v642 = vmax.f32 %v599, 0.0
    %v643 = vmax.f32 %v602, 0.0
    %v644 = vmax.f32 %v605, 0.0
    %v645 = vmax.f32 %v608, 0.0
    %v646 = vmax.f32 %v611, 0.0
    %v647 = vmax.f32 %v614, 0.0
    %v648 = vld [vmem:[#allocation8] sm:$0xff]
    %v649 = vld [vmem:[#allocation8 + $0x8] sm:$0xff]
    %v650 = vld [vmem:[#allocation8 + $0x10] sm:$0xff]
    %v651 = vld [vmem:[#allocation8 + $0x18] sm:$0xff]
    %v652 = vld [vmem:[#allocation8 + $0x20] sm:$0xff]
    %v653 = vld [vmem:[#allocation8 + $0x28] sm:$0xff]
    %v654 = vld [vmem:[#allocation8 + $0x30] sm:$0xff]
    %v655 = vld [vmem:[#allocation8 + $0x38] sm:$0xff]
    %v656 = vld [vmem:[#allocation8 + $0x40] sm:$0xff]
    %v657 = vld [vmem:[#allocation8 + $0x48] sm:$0xff]
    %v658 = vld [vmem:[#allocation8 + $0x50] sm:$0xff]
    %v659 = vld [vmem:[#allocation8 + $0x58] sm:$0xff]
    %v660 = vld [vmem:[#allocation8 + $0x60] sm:$0xff]
    %v661 = vld [vmem:[#allocation8 + $0x68] sm:$0xff]
    %v662 = vld [vmem:[#allocation8 + $0x70] sm:$0xff]
    %v663 = vld [vmem:[#allocation8 + $0x78] sm:$0xff]
    %v664 = vld [vmem:[%s7] sm:$0x1]
    %v666 = vperm.slane %v664, 0
    %668 = vmatpush.msra.mxu0 %v663
    %669 = vmatpush.msra.mxu0 %v662
    %670 = vmatpush.msra.mxu0 %v661
    %671 = vmatpush.msra.mxu0 %v660
    %672 = vmatpush.msra.mxu0 %v659
    %673 = vmatpush.msra.mxu0 %v658
    %674 = vmatpush.msra.mxu0 %v657
    %675 = vmatpush.msra.mxu0 %v656
    %676 = vmatpush.msra.mxu0 %v655
    %677 = vmatpush.msra.mxu0 %v654
    %678 = vmatpush.msra.mxu0 %v653
    %679 = vmatpush.msra.mxu0 %v652
    %680 = vmatpush.msra.mxu0 %v651
    %681 = vmatpush.msra.mxu0 %v650
    %682 = vmatpush.msra.mxu0 %v649
    %683 = vmatpush.msra.mxu0 %v648
    %684 = vmatmul.f32.gmra.mxu0 %v616
    %v685 = vpop.f32.mrf.mxu0
    %v686 = vadd.f32 %v666, %v685
    %687 = vmatmul.f32.gmra.mxu0 %v617
    %v688 = vpop.f32.mrf.mxu0
    %v689 = vadd.f32 %v666, %v688
    %690 = vmatmul.f32.gmra.mxu0 %v618
    %v691 = vpop.f32.mrf.mxu0
    %v692 = vadd.f32 %v666, %v691
    %693 = vmatmul.f32.gmra.mxu0 %v619
    %v694 = vpop.f32.mrf.mxu0
    %v695 = vadd.f32 %v666, %v694
    %696 = vmatmul.f32.gmra.mxu0 %v620
    %v697 = vpop.f32.mrf.mxu0
    %v698 = vadd.f32 %v666, %v697
    %699 = vmatmul.f32.gmra.mxu0 %v621
    %v700 = vpop.f32.mrf.mxu0
    %v701 = vadd.f32 %v666, %v700
    %702 = vmatmul.f32.gmra.mxu0 %v622
    %v703 = vpop.f32.mrf.mxu0
    %v704 = vadd.f32 %v666, %v703
    %705 = vmatmul.f32.gmra.mxu0 %v623
    %v706 = vpop.f32.mrf.mxu0
    %v707 = vadd.f32 %v666, %v706
    %708 = vmatmul.f32.gmra.mxu0 %v624
    %v709 = vpop.f32.mrf.mxu0
    %v710 = vadd.f32 %v666, %v709
    %711 = vmatmul.f32.gmra.mxu0 %v625
    %v712 = vpop.f32.mrf.mxu0
    %v713 = vadd.f32 %v666, %v712
    %714 = vmatmul.f32.gmra.mxu0 %v626
    %v715 = vpop.f32.mrf.mxu0
    %v716 = vadd.f32 %v666, %v715
    %717 = vmatmul.f32.gmra.mxu0 %v627
    %v718 = vpop.f32.mrf.mxu0
    %v719 = vadd.f32 %v666, %v718
    %720 = vmatmul.f32.gmra.mxu0 %v628
    %v721 = vpop.f32.mrf.mxu0
    %v722 = vadd.f32 %v666, %v721
    %723 = vmatmul.f32.gmra.mxu0 %v629
    %v724 = vpop.f32.mrf.mxu0
    %v725 = vadd.f32 %v666, %v724
    %726 = vmatmul.f32.gmra.mxu0 %v630
    %v727 = vpop.f32.mrf.mxu0
    %v728 = vadd.f32 %v666, %v727
    %729 = vmatmul.f32.gmra.mxu0 %v631
    %v730 = vpop.f32.mrf.mxu0
    %v731 = vadd.f32 %v666, %v730
    %732 = vmatmul.f32.gmra.mxu0 %v632
    %v733 = vpop.f32.mrf.mxu0
    %v734 = vadd.f32 %v666, %v733
    %735 = vmatmul.f32.gmra.mxu0 %v633
    %v736 = vpop.f32.mrf.mxu0
    %v737 = vadd.f32 %v666, %v736
    %738 = vmatmul.f32.gmra.mxu0 %v634
    %v739 = vpop.f32.mrf.mxu0
    %v740 = vadd.f32 %v666, %v739
    %741 = vmatmul.f32.gmra.mxu0 %v635
    %v742 = vpop.f32.mrf.mxu0
    %v743 = vadd.f32 %v666, %v742
    %744 = vmatmul.f32.gmra.mxu0 %v636
    %v745 = vpop.f32.mrf.mxu0
    %v746 = vadd.f32 %v666, %v745
    %747 = vmatmul.f32.gmra.mxu0 %v637
    %v748 = vpop.f32.mrf.mxu0
    %v749 = vadd.f32 %v666, %v748
    %750 = vmatmul.f32.gmra.mxu0 %v638
    %v751 = vpop.f32.mrf.mxu0
    %v752 = vadd.f32 %v666, %v751
    %753 = vmatmul.f32.gmra.mxu0 %v639
    %v754 = vpop.f32.mrf.mxu0
    %v755 = vadd.f32 %v666, %v754
    %756 = vmatmul.f32.gmra.mxu0 %v640
    %v757 = vpop.f32.mrf.mxu0
    %v758 = vadd.f32 %v666, %v757
    %759 = vmatmul.f32.gmra.mxu0 %v641
    %v760 = vpop.f32.mrf.mxu0
    %v761 = vadd.f32 %v666, %v760
    %762 = vmatmul.f32.gmra.mxu0 %v642
    %v763 = vpop.f32.mrf.mxu0
    %v764 = vadd.f32 %v666, %v763
    %765 = vmatmul.f32.gmra.mxu0 %v643
    %v766 = vpop.f32.mrf.mxu0
    %v767 = vadd.f32 %v666, %v766
    %768 = vmatmul.f32.gmra.mxu0 %v644
    %v769 = vpop.f32.mrf.mxu0
    %v770 = vadd.f32 %v666, %v769
    %771 = vmatmul.f32.gmra.mxu0 %v645
    %v772 = vpop.f32.mrf.mxu0
    %v773 = vadd.f32 %v666, %v772
    %774 = vmatmul.f32.gmra.mxu0 %v646
    %v775 = vpop.f32.mrf.mxu0
    %v776 = vadd.f32 %v666, %v775
    %777 = vmatmul.f32.gmra.mxu0 %v647
    %v778 = vpop.f32.mrf.mxu0
    %v779 = vadd.f32 %v666, %v778
    %780 = vdwg.mxu0
    %v781 = vxor.u32 %v686, 2147483648
    %v782 = vxor.u32 %v689, 2147483648
    %v783 = vxor.u32 %v692, 2147483648
    %v784 = vxor.u32 %v695, 2147483648
    %v785 = vxor.u32 %v698, 2147483648
    %v786 = vxor.u32 %v701, 2147483648
    %v787 = vxor.u32 %v704, 2147483648
    %v788 = vxor.u32 %v707, 2147483648
    %v789 = vxor.u32 %v710, 2147483648
    %v790 = vxor.u32 %v713, 2147483648
    %v791 = vxor.u32 %v716, 2147483648
    %v792 = vxor.u32 %v719, 2147483648
    %v793 = vxor.u32 %v722, 2147483648
    %v794 = vxor.u32 %v725, 2147483648
    %v795 = vxor.u32 %v728, 2147483648
    %v796 = vxor.u32 %v731, 2147483648
    %v797 = vxor.u32 %v734, 2147483648
    %v798 = vxor.u32 %v737, 2147483648
    %v799 = vxor.u32 %v740, 2147483648
    %v800 = vxor.u32 %v743, 2147483648
    %v801 = vxor.u32 %v746, 2147483648
    %v802 = vxor.u32 %v749, 2147483648
    %v803 = vxor.u32 %v752, 2147483648
    %v804 = vxor.u32 %v755, 2147483648
    %v805 = vxor.u32 %v758, 2147483648
    %v806 = vxor.u32 %v761, 2147483648
    %v807 = vxor.u32 %v764, 2147483648
    %v808 = vxor.u32 %v767, 2147483648
    %v809 = vxor.u32 %v770, 2147483648
    %v810 = vxor.u32 %v773, 2147483648
    %v811 = vxor.u32 %v776, 2147483648
    %v812 = vxor.u32 %v779, 2147483648
    %v813 = vmul.f32 %v781, 1.442695
    %v814 = vpow.pop %v813
    %v815 = vmul.f32 %v782, 1.442695
    %v816 = vpow.pop %v815
    %v817 = vmul.f32 %v783, 1.442695
    %v818 = vpow.pop %v817
    %v819 = vmul.f32 %v784, 1.442695
    %v820 = vpow.pop %v819
    %v821 = vmul.f32 %v785, 1.442695
    %v822 = vpow.pop %v821
    %v823 = vmul.f32 %v786, 1.442695
    %v824 = vpow.pop %v823
    %v825 = vmul.f32 %v787, 1.442695
    %v826 = vpow.pop %v825
    %v827 = vmul.f32 %v788, 1.442695
    %v828 = vpow.pop %v827
    %v829 = vmul.f32 %v789, 1.442695
    %v830 = vpow.pop %v829
    %v831 = vmul.f32 %v790, 1.442695
    %v832 = vpow.pop %v831
    %v833 = vmul.f32 %v791, 1.442695
    %v834 = vpow.pop %v833
    %v835 = vmul.f32 %v792, 1.442695
    %v836 = vpow.pop %v835
    %v837 = vmul.f32 %v793, 1.442695
    %v838 = vpow.pop %v837
    %v839 = vmul.f32 %v794, 1.442695
    %v840 = vpow.pop %v839
    %v841 = vmul.f32 %v795, 1.442695
    %v842 = vpow.pop %v841
    %v843 = vmul.f32 %v796, 1.442695
    %v844 = vpow.pop %v843
    %v845 = vmul.f32 %v797, 1.442695
    %v846 = vpow.pop %v845
    %v847 = vmul.f32 %v798, 1.442695
    %v848 = vpow.pop %v847
    %v849 = vmul.f32 %v799, 1.442695
    %v850 = vpow.pop %v849
    %v851 = vmul.f32 %v800, 1.442695
    %v852 = vpow.pop %v851
    %v853 = vmul.f32 %v801, 1.442695
    %v854 = vpow.pop %v853
    %v855 = vmul.f32 %v802, 1.442695
    %v856 = vpow.pop %v855
    %v857 = vmul.f32 %v803, 1.442695
    %v858 = vpow.pop %v857
    %v859 = vmul.f32 %v804, 1.442695
    %v860 = vpow.pop %v859
    %v861 = vmul.f32 %v805, 1.442695
    %v862 = vpow.pop %v861
    %v863 = vmul.f32 %v806, 1.442695
    %v864 = vpow.pop %v863
    %v865 = vmul.f32 %v807, 1.442695
    %v866 = vpow.pop %v865
    %v867 = vmul.f32 %v808, 1.442695
    %v868 = vpow.pop %v867
    %v869 = vmul.f32 %v809, 1.442695
    %v870 = vpow.pop %v869
    %v871 = vmul.f32 %v810, 1.442695
    %v872 = vpow.pop %v871
    %v873 = vmul.f32 %v811, 1.442695
    %v874 = vpow.pop %v873
    %v875 = vmul.f32 %v812, 1.442695
    %v876 = vpow.pop %v875
    %v877 = vadd.f32 %v814, 1.0
    %v878 = vadd.f32 %v816, 1.0
    %v879 = vadd.f32 %v818, 1.0
    %v880 = vadd.f32 %v820, 1.0
    %v881 = vadd.f32 %v822, 1.0
    %v882 = vadd.f32 %v824, 1.0
    %v883 = vadd.f32 %v826, 1.0
    %v884 = vadd.f32 %v828, 1.0
    %v885 = vadd.f32 %v830, 1.0
    %v886 = vadd.f32 %v832, 1.0
    %v887 = vadd.f32 %v834, 1.0
    %v888 = vadd.f32 %v836, 1.0
    %v889 = vadd.f32 %v838, 1.0
    %v890 = vadd.f32 %v840, 1.0
    %v891 = vadd.f32 %v842, 1.0
    %v892 = vadd.f32 %v844, 1.0
    %v893 = vadd.f32 %v846, 1.0
    %v894 = vadd.f32 %v848, 1.0
    %v895 = vadd.f32 %v850, 1.0
    %v896 = vadd.f32 %v852, 1.0
    %v897 = vadd.f32 %v854, 1.0
    %v898 = vadd.f32 %v856, 1.0
    %v899 = vadd.f32 %v858, 1.0
    %v900 = vadd.f32 %v860, 1.0
    %v901 = vadd.f32 %v862, 1.0
    %v902 = vadd.f32 %v864, 1.0
    %v903 = vadd.f32 %v866, 1.0
    %v904 = vadd.f32 %v868, 1.0
    %v905 = vadd.f32 %v870, 1.0
    %v906 = vadd.f32 %v872, 1.0
    %v907 = vadd.f32 %v874, 1.0
    %v908 = vadd.f32 %v876, 1.0
    %v909 = vrcp.pop %v877
    %v910 = vmul.f32 %v877, %v909
    %v911 = vsub.f32 1.0, %v910
    %v912 = vmul.f32 %v909, %v911
    %v913 = vadd.f32 %v909, %v912
    %vm914 = vweird.f32 %v877
    %vm915 = vweird.f32 %v909
    %vm916 = vmor %vm914, %vm915
    %v917 = vsel %vm916, %v909, %v913
    %v918 = vand.u32 2147483647, %v877
    %vm919 = vcmp.eq.f32.partialorder %v918, 8.507059e+37
    %v920 = vand.u32 %v877, 2147483648
    %v921 = vor.u32 1.1754944e-38, %v920
    %v922 = vsel %vm919, %v921, %v917
    %v923 = vmul.f32 1.0, %v922
    %v924 = vrcp.pop %v878
    %v925 = vmul.f32 %v878, %v924
    %v926 = vsub.f32 1.0, %v925
    %v927 = vmul.f32 %v924, %v926
    %v928 = vadd.f32 %v924, %v927
    %vm929 = vweird.f32 %v878
    %vm930 = vweird.f32 %v924
    %vm931 = vmor %vm929, %vm930
    %v932 = vsel %vm931, %v924, %v928
    %v933 = vand.u32 2147483647, %v878
    %vm934 = vcmp.eq.f32.partialorder %v933, 8.507059e+37
    %v935 = vand.u32 %v878, 2147483648
    %v936 = vor.u32 1.1754944e-38, %v935
    %v937 = vsel %vm934, %v936, %v932
    %v938 = vmul.f32 1.0, %v937
    %v939 = vrcp.pop %v879
    %v940 = vmul.f32 %v879, %v939
    %v941 = vsub.f32 1.0, %v940
    %v942 = vmul.f32 %v939, %v941
    %v943 = vadd.f32 %v939, %v942
    %vm944 = vweird.f32 %v879
    %vm945 = vweird.f32 %v939
    %vm946 = vmor %vm944, %vm945
    %v947 = vsel %vm946, %v939, %v943
    %v948 = vand.u32 2147483647, %v879
    %vm949 = vcmp.eq.f32.partialorder %v948, 8.507059e+37
    %v950 = vand.u32 %v879, 2147483648
    %v951 = vor.u32 1.1754944e-38, %v950
    %v952 = vsel %vm949, %v951, %v947
    %v953 = vmul.f32 1.0, %v952
    %v954 = vrcp.pop %v880
    %v955 = vmul.f32 %v880, %v954
    %v956 = vsub.f32 1.0, %v955
    %v957 = vmul.f32 %v954, %v956
    %v958 = vadd.f32 %v954, %v957
    %vm959 = vweird.f32 %v880
    %vm960 = vweird.f32 %v954
    %vm961 = vmor %vm959, %vm960
    %v962 = vsel %vm961, %v954, %v958
    %v963 = vand.u32 2147483647, %v880
    %vm964 = vcmp.eq.f32.partialorder %v963, 8.507059e+37
    %v965 = vand.u32 %v880, 2147483648
    %v966 = vor.u32 1.1754944e-38, %v965
    %v967 = vsel %vm964, %v966, %v962
    %v968 = vmul.f32 1.0, %v967
    %v969 = vrcp.pop %v881
    %v970 = vmul.f32 %v881, %v969
    %v971 = vsub.f32 1.0, %v970
    %v972 = vmul.f32 %v969, %v971
    %v973 = vadd.f32 %v969, %v972
    %vm974 = vweird.f32 %v881
    %vm975 = vweird.f32 %v969
    %vm976 = vmor %vm974, %vm975
    %v977 = vsel %vm976, %v969, %v973
    %v978 = vand.u32 2147483647, %v881
    %vm979 = vcmp.eq.f32.partialorder %v978, 8.507059e+37
    %v980 = vand.u32 %v881, 2147483648
    %v981 = vor.u32 1.1754944e-38, %v980
    %v982 = vsel %vm979, %v981, %v977
    %v983 = vmul.f32 1.0, %v982
    %v984 = vrcp.pop %v882
    %v985 = vmul.f32 %v882, %v984
    %v986 = vsub.f32 1.0, %v985
    %v987 = vmul.f32 %v984, %v986
    %v988 = vadd.f32 %v984, %v987
    %vm989 = vweird.f32 %v882
    %vm990 = vweird.f32 %v984
    %vm991 = vmor %vm989, %vm990
    %v992 = vsel %vm991, %v984, %v988
    %v993 = vand.u32 2147483647, %v882
    %vm994 = vcmp.eq.f32.partialorder %v993, 8.507059e+37
    %v995 = vand.u32 %v882, 2147483648
    %v996 = vor.u32 1.1754944e-38, %v995
    %v997 = vsel %vm994, %v996, %v992
    %v998 = vmul.f32 1.0, %v997
    %v999 = vrcp.pop %v883
    %v1000 = vmul.f32 %v883, %v999
    %v1001 = vsub.f32 1.0, %v1000
    %v1002 = vmul.f32 %v999, %v1001
    %v1003 = vadd.f32 %v999, %v1002
    %vm1004 = vweird.f32 %v883
    %vm1005 = vweird.f32 %v999
    %vm1006 = vmor %vm1004, %vm1005
    %v1007 = vsel %vm1006, %v999, %v1003
    %v1008 = vand.u32 2147483647, %v883
    %vm1009 = vcmp.eq.f32.partialorder %v1008, 8.507059e+37
    %v1010 = vand.u32 %v883, 2147483648
    %v1011 = vor.u32 1.1754944e-38, %v1010
    %v1012 = vsel %vm1009, %v1011, %v1007
    %v1013 = vmul.f32 1.0, %v1012
    %v1014 = vrcp.pop %v884
    %v1015 = vmul.f32 %v884, %v1014
    %v1016 = vsub.f32 1.0, %v1015
    %v1017 = vmul.f32 %v1014, %v1016
    %v1018 = vadd.f32 %v1014, %v1017
    %vm1019 = vweird.f32 %v884
    %vm1020 = vweird.f32 %v1014
    %vm1021 = vmor %vm1019, %vm1020
    %v1022 = vsel %vm1021, %v1014, %v1018
    %v1023 = vand.u32 2147483647, %v884
    %vm1024 = vcmp.eq.f32.partialorder %v1023, 8.507059e+37
    %v1025 = vand.u32 %v884, 2147483648
    %v1026 = vor.u32 1.1754944e-38, %v1025
    %v1027 = vsel %vm1024, %v1026, %v1022
    %v1028 = vmul.f32 1.0, %v1027
    %v1029 = vrcp.pop %v885
    %v1030 = vmul.f32 %v885, %v1029
    %v1031 = vsub.f32 1.0, %v1030
    %v1032 = vmul.f32 %v1029, %v1031
    %v1033 = vadd.f32 %v1029, %v1032
    %vm1034 = vweird.f32 %v885
    %vm1035 = vweird.f32 %v1029
    %vm1036 = vmor %vm1034, %vm1035
    %v1037 = vsel %vm1036, %v1029, %v1033
    %v1038 = vand.u32 2147483647, %v885
    %vm1039 = vcmp.eq.f32.partialorder %v1038, 8.507059e+37
    %v1040 = vand.u32 %v885, 2147483648
    %v1041 = vor.u32 1.1754944e-38, %v1040
    %v1042 = vsel %vm1039, %v1041, %v1037
    %v1043 = vmul.f32 1.0, %v1042
    %v1044 = vrcp.pop %v886
    %v1045 = vmul.f32 %v886, %v1044
    %v1046 = vsub.f32 1.0, %v1045
    %v1047 = vmul.f32 %v1044, %v1046
    %v1048 = vadd.f32 %v1044, %v1047
    %vm1049 = vweird.f32 %v886
    %vm1050 = vweird.f32 %v1044
    %vm1051 = vmor %vm1049, %vm1050
    %v1052 = vsel %vm1051, %v1044, %v1048
    %v1053 = vand.u32 2147483647, %v886
    %vm1054 = vcmp.eq.f32.partialorder %v1053, 8.507059e+37
    %v1055 = vand.u32 %v886, 2147483648
    %v1056 = vor.u32 1.1754944e-38, %v1055
    %v1057 = vsel %vm1054, %v1056, %v1052
    %v1058 = vmul.f32 1.0, %v1057
    %v1059 = vrcp.pop %v887
    %v1060 = vmul.f32 %v887, %v1059
    %v1061 = vsub.f32 1.0, %v1060
    %v1062 = vmul.f32 %v1059, %v1061
    %v1063 = vadd.f32 %v1059, %v1062
    %vm1064 = vweird.f32 %v887
    %vm1065 = vweird.f32 %v1059
    %vm1066 = vmor %vm1064, %vm1065
    %v1067 = vsel %vm1066, %v1059, %v1063
    %v1068 = vand.u32 2147483647, %v887
    %vm1069 = vcmp.eq.f32.partialorder %v1068, 8.507059e+37
    %v1070 = vand.u32 %v887, 2147483648
    %v1071 = vor.u32 1.1754944e-38, %v1070
    %v1072 = vsel %vm1069, %v1071, %v1067
    %v1073 = vmul.f32 1.0, %v1072
    %v1074 = vrcp.pop %v888
    %v1075 = vmul.f32 %v888, %v1074
    %v1076 = vsub.f32 1.0, %v1075
    %v1077 = vmul.f32 %v1074, %v1076
    %v1078 = vadd.f32 %v1074, %v1077
    %vm1079 = vweird.f32 %v888
    %vm1080 = vweird.f32 %v1074
    %vm1081 = vmor %vm1079, %vm1080
    %v1082 = vsel %vm1081, %v1074, %v1078
    %v1083 = vand.u32 2147483647, %v888
    %vm1084 = vcmp.eq.f32.partialorder %v1083, 8.507059e+37
    %v1085 = vand.u32 %v888, 2147483648
    %v1086 = vor.u32 1.1754944e-38, %v1085
    %v1087 = vsel %vm1084, %v1086, %v1082
    %v1088 = vmul.f32 1.0, %v1087
    %v1089 = vrcp.pop %v889
    %v1090 = vmul.f32 %v889, %v1089
    %v1091 = vsub.f32 1.0, %v1090
    %v1092 = vmul.f32 %v1089, %v1091
    %v1093 = vadd.f32 %v1089, %v1092
    %vm1094 = vweird.f32 %v889
    %vm1095 = vweird.f32 %v1089
    %vm1096 = vmor %vm1094, %vm1095
    %v1097 = vsel %vm1096, %v1089, %v1093
    %v1098 = vand.u32 2147483647, %v889
    %vm1099 = vcmp.eq.f32.partialorder %v1098, 8.507059e+37
    %v1100 = vand.u32 %v889, 2147483648
    %v1101 = vor.u32 1.1754944e-38, %v1100
    %v1102 = vsel %vm1099, %v1101, %v1097
    %v1103 = vmul.f32 1.0, %v1102
    %v1104 = vrcp.pop %v890
    %v1105 = vmul.f32 %v890, %v1104
    %v1106 = vsub.f32 1.0, %v1105
    %v1107 = vmul.f32 %v1104, %v1106
    %v1108 = vadd.f32 %v1104, %v1107
    %vm1109 = vweird.f32 %v890
    %vm1110 = vweird.f32 %v1104
    %vm1111 = vmor %vm1109, %vm1110
    %v1112 = vsel %vm1111, %v1104, %v1108
    %v1113 = vand.u32 2147483647, %v890
    %vm1114 = vcmp.eq.f32.partialorder %v1113, 8.507059e+37
    %v1115 = vand.u32 %v890, 2147483648
    %v1116 = vor.u32 1.1754944e-38, %v1115
    %v1117 = vsel %vm1114, %v1116, %v1112
    %v1118 = vmul.f32 1.0, %v1117
    %v1119 = vrcp.pop %v891
    %v1120 = vmul.f32 %v891, %v1119
    %v1121 = vsub.f32 1.0, %v1120
    %v1122 = vmul.f32 %v1119, %v1121
    %v1123 = vadd.f32 %v1119, %v1122
    %vm1124 = vweird.f32 %v891
    %vm1125 = vweird.f32 %v1119
    %vm1126 = vmor %vm1124, %vm1125
    %v1127 = vsel %vm1126, %v1119, %v1123
    %v1128 = vand.u32 2147483647, %v891
    %vm1129 = vcmp.eq.f32.partialorder %v1128, 8.507059e+37
    %v1130 = vand.u32 %v891, 2147483648
    %v1131 = vor.u32 1.1754944e-38, %v1130
    %v1132 = vsel %vm1129, %v1131, %v1127
    %v1133 = vmul.f32 1.0, %v1132
    %v1134 = vrcp.pop %v892
    %v1135 = vmul.f32 %v892, %v1134
    %v1136 = vsub.f32 1.0, %v1135
    %v1137 = vmul.f32 %v1134, %v1136
    %v1138 = vadd.f32 %v1134, %v1137
    %vm1139 = vweird.f32 %v892
    %vm1140 = vweird.f32 %v1134
    %vm1141 = vmor %vm1139, %vm1140
    %v1142 = vsel %vm1141, %v1134, %v1138
    %v1143 = vand.u32 2147483647, %v892
    %vm1144 = vcmp.eq.f32.partialorder %v1143, 8.507059e+37
    %v1145 = vand.u32 %v892, 2147483648
    %v1146 = vor.u32 1.1754944e-38, %v1145
    %v1147 = vsel %vm1144, %v1146, %v1142
    %v1148 = vmul.f32 1.0, %v1147
    %v1149 = vrcp.pop %v893
    %v1150 = vmul.f32 %v893, %v1149
    %v1151 = vsub.f32 1.0, %v1150
    %v1152 = vmul.f32 %v1149, %v1151
    %v1153 = vadd.f32 %v1149, %v1152
    %vm1154 = vweird.f32 %v893
    %vm1155 = vweird.f32 %v1149
    %vm1156 = vmor %vm1154, %vm1155
    %v1157 = vsel %vm1156, %v1149, %v1153
    %v1158 = vand.u32 2147483647, %v893
    %vm1159 = vcmp.eq.f32.partialorder %v1158, 8.507059e+37
    %v1160 = vand.u32 %v893, 2147483648
    %v1161 = vor.u32 1.1754944e-38, %v1160
    %v1162 = vsel %vm1159, %v1161, %v1157
    %v1163 = vmul.f32 1.0, %v1162
    %v1164 = vrcp.pop %v894
    %v1165 = vmul.f32 %v894, %v1164
    %v1166 = vsub.f32 1.0, %v1165
    %v1167 = vmul.f32 %v1164, %v1166
    %v1168 = vadd.f32 %v1164, %v1167
    %vm1169 = vweird.f32 %v894
    %vm1170 = vweird.f32 %v1164
    %vm1171 = vmor %vm1169, %vm1170
    %v1172 = vsel %vm1171, %v1164, %v1168
    %v1173 = vand.u32 2147483647, %v894
    %vm1174 = vcmp.eq.f32.partialorder %v1173, 8.507059e+37
    %v1175 = vand.u32 %v894, 2147483648
    %v1176 = vor.u32 1.1754944e-38, %v1175
    %v1177 = vsel %vm1174, %v1176, %v1172
    %v1178 = vmul.f32 1.0, %v1177
    %v1179 = vrcp.pop %v895
    %v1180 = vmul.f32 %v895, %v1179
    %v1181 = vsub.f32 1.0, %v1180
    %v1182 = vmul.f32 %v1179, %v1181
    %v1183 = vadd.f32 %v1179, %v1182
    %vm1184 = vweird.f32 %v895
    %vm1185 = vweird.f32 %v1179
    %vm1186 = vmor %vm1184, %vm1185
    %v1187 = vsel %vm1186, %v1179, %v1183
    %v1188 = vand.u32 2147483647, %v895
    %vm1189 = vcmp.eq.f32.partialorder %v1188, 8.507059e+37
    %v1190 = vand.u32 %v895, 2147483648
    %v1191 = vor.u32 1.1754944e-38, %v1190
    %v1192 = vsel %vm1189, %v1191, %v1187
    %v1193 = vmul.f32 1.0, %v1192
    %v1194 = vrcp.pop %v896
    %v1195 = vmul.f32 %v896, %v1194
    %v1196 = vsub.f32 1.0, %v1195
    %v1197 = vmul.f32 %v1194, %v1196
    %v1198 = vadd.f32 %v1194, %v1197
    %vm1199 = vweird.f32 %v896
    %vm1200 = vweird.f32 %v1194
    %vm1201 = vmor %vm1199, %vm1200
    %v1202 = vsel %vm1201, %v1194, %v1198
    %v1203 = vand.u32 2147483647, %v896
    %vm1204 = vcmp.eq.f32.partialorder %v1203, 8.507059e+37
    %v1205 = vand.u32 %v896, 2147483648
    %v1206 = vor.u32 1.1754944e-38, %v1205
    %v1207 = vsel %vm1204, %v1206, %v1202
    %v1208 = vmul.f32 1.0, %v1207
    %v1209 = vrcp.pop %v897
    %v1210 = vmul.f32 %v897, %v1209
    %v1211 = vsub.f32 1.0, %v1210
    %v1212 = vmul.f32 %v1209, %v1211
    %v1213 = vadd.f32 %v1209, %v1212
    %vm1214 = vweird.f32 %v897
    %vm1215 = vweird.f32 %v1209
    %vm1216 = vmor %vm1214, %vm1215
    %v1217 = vsel %vm1216, %v1209, %v1213
    %v1218 = vand.u32 2147483647, %v897
    %vm1219 = vcmp.eq.f32.partialorder %v1218, 8.507059e+37
    %v1220 = vand.u32 %v897, 2147483648
    %v1221 = vor.u32 1.1754944e-38, %v1220
    %v1222 = vsel %vm1219, %v1221, %v1217
    %v1223 = vmul.f32 1.0, %v1222
    %v1224 = vrcp.pop %v898
    %v1225 = vmul.f32 %v898, %v1224
    %v1226 = vsub.f32 1.0, %v1225
    %v1227 = vmul.f32 %v1224, %v1226
    %v1228 = vadd.f32 %v1224, %v1227
    %vm1229 = vweird.f32 %v898
    %vm1230 = vweird.f32 %v1224
    %vm1231 = vmor %vm1229, %vm1230
    %v1232 = vsel %vm1231, %v1224, %v1228
    %v1233 = vand.u32 2147483647, %v898
    %vm1234 = vcmp.eq.f32.partialorder %v1233, 8.507059e+37
    %v1235 = vand.u32 %v898, 2147483648
    %v1236 = vor.u32 1.1754944e-38, %v1235
    %v1237 = vsel %vm1234, %v1236, %v1232
    %v1238 = vmul.f32 1.0, %v1237
    %v1239 = vrcp.pop %v899
    %v1240 = vmul.f32 %v899, %v1239
    %v1241 = vsub.f32 1.0, %v1240
    %v1242 = vmul.f32 %v1239, %v1241
    %v1243 = vadd.f32 %v1239, %v1242
    %vm1244 = vweird.f32 %v899
    %vm1245 = vweird.f32 %v1239
    %vm1246 = vmor %vm1244, %vm1245
    %v1247 = vsel %vm1246, %v1239, %v1243
    %v1248 = vand.u32 2147483647, %v899
    %vm1249 = vcmp.eq.f32.partialorder %v1248, 8.507059e+37
    %v1250 = vand.u32 %v899, 2147483648
    %v1251 = vor.u32 1.1754944e-38, %v1250
    %v1252 = vsel %vm1249, %v1251, %v1247
    %v1253 = vmul.f32 1.0, %v1252
    %v1254 = vrcp.pop %v900
    %v1255 = vmul.f32 %v900, %v1254
    %v1256 = vsub.f32 1.0, %v1255
    %v1257 = vmul.f32 %v1254, %v1256
    %v1258 = vadd.f32 %v1254, %v1257
    %vm1259 = vweird.f32 %v900
    %vm1260 = vweird.f32 %v1254
    %vm1261 = vmor %vm1259, %vm1260
    %v1262 = vsel %vm1261, %v1254, %v1258
    %v1263 = vand.u32 2147483647, %v900
    %vm1264 = vcmp.eq.f32.partialorder %v1263, 8.507059e+37
    %v1265 = vand.u32 %v900, 2147483648
    %v1266 = vor.u32 1.1754944e-38, %v1265
    %v1267 = vsel %vm1264, %v1266, %v1262
    %v1268 = vmul.f32 1.0, %v1267
    %v1269 = vrcp.pop %v901
    %v1270 = vmul.f32 %v901, %v1269
    %v1271 = vsub.f32 1.0, %v1270
    %v1272 = vmul.f32 %v1269, %v1271
    %v1273 = vadd.f32 %v1269, %v1272
    %vm1274 = vweird.f32 %v901
    %vm1275 = vweird.f32 %v1269
    %vm1276 = vmor %vm1274, %vm1275
    %v1277 = vsel %vm1276, %v1269, %v1273
    %v1278 = vand.u32 2147483647, %v901
    %vm1279 = vcmp.eq.f32.partialorder %v1278, 8.507059e+37
    %v1280 = vand.u32 %v901, 2147483648
    %v1281 = vor.u32 1.1754944e-38, %v1280
    %v1282 = vsel %vm1279, %v1281, %v1277
    %v1283 = vmul.f32 1.0, %v1282
    %v1284 = vrcp.pop %v902
    %v1285 = vmul.f32 %v902, %v1284
    %v1286 = vsub.f32 1.0, %v1285
    %v1287 = vmul.f32 %v1284, %v1286
    %v1288 = vadd.f32 %v1284, %v1287
    %vm1289 = vweird.f32 %v902
    %vm1290 = vweird.f32 %v1284
    %vm1291 = vmor %vm1289, %vm1290
    %v1292 = vsel %vm1291, %v1284, %v1288
    %v1293 = vand.u32 2147483647, %v902
    %vm1294 = vcmp.eq.f32.partialorder %v1293, 8.507059e+37
    %v1295 = vand.u32 %v902, 2147483648
    %v1296 = vor.u32 1.1754944e-38, %v1295
    %v1297 = vsel %vm1294, %v1296, %v1292
    %v1298 = vmul.f32 1.0, %v1297
    %v1299 = vrcp.pop %v903
    %v1300 = vmul.f32 %v903, %v1299
    %v1301 = vsub.f32 1.0, %v1300
    %v1302 = vmul.f32 %v1299, %v1301
    %v1303 = vadd.f32 %v1299, %v1302
    %vm1304 = vweird.f32 %v903
    %vm1305 = vweird.f32 %v1299
    %vm1306 = vmor %vm1304, %vm1305
    %v1307 = vsel %vm1306, %v1299, %v1303
    %v1308 = vand.u32 2147483647, %v903
    %vm1309 = vcmp.eq.f32.partialorder %v1308, 8.507059e+37
    %v1310 = vand.u32 %v903, 2147483648
    %v1311 = vor.u32 1.1754944e-38, %v1310
    %v1312 = vsel %vm1309, %v1311, %v1307
    %v1313 = vmul.f32 1.0, %v1312
    %v1314 = vrcp.pop %v904
    %v1315 = vmul.f32 %v904, %v1314
    %v1316 = vsub.f32 1.0, %v1315
    %v1317 = vmul.f32 %v1314, %v1316
    %v1318 = vadd.f32 %v1314, %v1317
    %vm1319 = vweird.f32 %v904
    %vm1320 = vweird.f32 %v1314
    %vm1321 = vmor %vm1319, %vm1320
    %v1322 = vsel %vm1321, %v1314, %v1318
    %v1323 = vand.u32 2147483647, %v904
    %vm1324 = vcmp.eq.f32.partialorder %v1323, 8.507059e+37
    %v1325 = vand.u32 %v904, 2147483648
    %v1326 = vor.u32 1.1754944e-38, %v1325
    %v1327 = vsel %vm1324, %v1326, %v1322
    %v1328 = vmul.f32 1.0, %v1327
    %v1329 = vrcp.pop %v905
    %v1330 = vmul.f32 %v905, %v1329
    %v1331 = vsub.f32 1.0, %v1330
    %v1332 = vmul.f32 %v1329, %v1331
    %v1333 = vadd.f32 %v1329, %v1332
    %vm1334 = vweird.f32 %v905
    %vm1335 = vweird.f32 %v1329
    %vm1336 = vmor %vm1334, %vm1335
    %v1337 = vsel %vm1336, %v1329, %v1333
    %v1338 = vand.u32 2147483647, %v905
    %vm1339 = vcmp.eq.f32.partialorder %v1338, 8.507059e+37
    %v1340 = vand.u32 %v905, 2147483648
    %v1341 = vor.u32 1.1754944e-38, %v1340
    %v1342 = vsel %vm1339, %v1341, %v1337
    %v1343 = vmul.f32 1.0, %v1342
    %v1344 = vrcp.pop %v906
    %v1345 = vmul.f32 %v906, %v1344
    %v1346 = vsub.f32 1.0, %v1345
    %v1347 = vmul.f32 %v1344, %v1346
    %v1348 = vadd.f32 %v1344, %v1347
    %vm1349 = vweird.f32 %v906
    %vm1350 = vweird.f32 %v1344
    %vm1351 = vmor %vm1349, %vm1350
    %v1352 = vsel %vm1351, %v1344, %v1348
    %v1353 = vand.u32 2147483647, %v906
    %vm1354 = vcmp.eq.f32.partialorder %v1353, 8.507059e+37
    %v1355 = vand.u32 %v906, 2147483648
    %v1356 = vor.u32 1.1754944e-38, %v1355
    %v1357 = vsel %vm1354, %v1356, %v1352
    %v1358 = vmul.f32 1.0, %v1357
    %v1359 = vrcp.pop %v907
    %v1360 = vmul.f32 %v907, %v1359
    %v1361 = vsub.f32 1.0, %v1360
    %v1362 = vmul.f32 %v1359, %v1361
    %v1363 = vadd.f32 %v1359, %v1362
    %vm1364 = vweird.f32 %v907
    %vm1365 = vweird.f32 %v1359
    %vm1366 = vmor %vm1364, %vm1365
    %v1367 = vsel %vm1366, %v1359, %v1363
    %v1368 = vand.u32 2147483647, %v907
    %vm1369 = vcmp.eq.f32.partialorder %v1368, 8.507059e+37
    %v1370 = vand.u32 %v907, 2147483648
    %v1371 = vor.u32 1.1754944e-38, %v1370
    %v1372 = vsel %vm1369, %v1371, %v1367
    %v1373 = vmul.f32 1.0, %v1372
    %v1374 = vrcp.pop %v908
    %v1375 = vmul.f32 %v908, %v1374
    %v1376 = vsub.f32 1.0, %v1375
    %v1377 = vmul.f32 %v1374, %v1376
    %v1378 = vadd.f32 %v1374, %v1377
    %vm1379 = vweird.f32 %v908
    %vm1380 = vweird.f32 %v1374
    %vm1381 = vmor %vm1379, %vm1380
    %v1382 = vsel %vm1381, %v1374, %v1378
    %v1383 = vand.u32 2147483647, %v908
    %vm1384 = vcmp.eq.f32.partialorder %v1383, 8.507059e+37
    %v1385 = vand.u32 %v908, 2147483648
    %v1386 = vor.u32 1.1754944e-38, %v1385
    %v1387 = vsel %vm1384, %v1386, %v1382
    %v1388 = vmul.f32 1.0, %v1387
    %1389 = vst [vmem:[#allocation10] sm:$0xff] %v923
    %1390 = vst [vmem:[#allocation10 + $0x8] sm:$0xff] %v938
    %1391 = vst [vmem:[#allocation10 + $0x10] sm:$0xff] %v953
    %1392 = vst [vmem:[#allocation10 + $0x18] sm:$0xff] %v968
    %1393 = vst [vmem:[#allocation10 + $0x20] sm:$0xff] %v983
    %1394 = vst [vmem:[#allocation10 + $0x28] sm:$0xff] %v998
    %1395 = vst [vmem:[#allocation10 + $0x30] sm:$0xff] %v1013
    %1396 = vst [vmem:[#allocation10 + $0x38] sm:$0xff] %v1028
    %1397 = vst [vmem:[#allocation10 + $0x40] sm:$0xff] %v1043
    %1398 = vst [vmem:[#allocation10 + $0x48] sm:$0xff] %v1058
    %1399 = vst [vmem:[#allocation10 + $0x50] sm:$0xff] %v1073
    %1400 = vst [vmem:[#allocation10 + $0x58] sm:$0xff] %v1088
    %1401 = vst [vmem:[#allocation10 + $0x60] sm:$0xff] %v1103
    %1402 = vst [vmem:[#allocation10 + $0x68] sm:$0xff] %v1118
    %1403 = vst [vmem:[#allocation10 + $0x70] sm:$0xff] %v1133
    %1404 = vst [vmem:[#allocation10 + $0x78] sm:$0xff] %v1148
    %1405 = vst [vmem:[#allocation10 + $0x80] sm:$0xff] %v1163
    %1406 = vst [vmem:[#allocation10 + $0x88] sm:$0xff] %v1178
    %1407 = vst [vmem:[#allocation10 + $0x90] sm:$0xff] %v1193
    %1408 = vst [vmem:[#allocation10 + $0x98] sm:$0xff] %v1208
    %1409 = vst [vmem:[#allocation10 + $0xa0] sm:$0xff] %v1223
    %1410 = vst [vmem:[#allocation10 + $0xa8] sm:$0xff] %v1238
    %1411 = vst [vmem:[#allocation10 + $0xb0] sm:$0xff] %v1253
    %1412 = vst [vmem:[#allocation10 + $0xb8] sm:$0xff] %v1268
    %1413 = vst [vmem:[#allocation10 + $0xc0] sm:$0xff] %v1283
    %1414 = vst [vmem:[#allocation10 + $0xc8] sm:$0xff] %v1298
    %1415 = vst [vmem:[#allocation10 + $0xd0] sm:$0xff] %v1313
    %1416 = vst [vmem:[#allocation10 + $0xd8] sm:$0xff] %v1328
    %1417 = vst [vmem:[#allocation10 + $0xe0] sm:$0xff] %v1343
    %1418 = vst [vmem:[#allocation10 + $0xe8] sm:$0xff] %v1358
    %1419 = vst [vmem:[#allocation10 + $0xf0] sm:$0xff] %v1373
    %1420 = vst [vmem:[#allocation10 + $0xf8] sm:$0xff] %v1388
    // Predicated region
    $region50: #{tpu_custom_call.1} parent=1 // pred_check
      _
    $region51: #{tpu_custom_call.1} parent=1 // pred_check_branch
      %1422 = sbr.rel (0) target = $region53
    $region52: #{tpu_custom_call.1} parent=1 // pred_region
      %1424 = vsyncadd [#allocation4], 0
      %s1425 = sshll.u32 [#allocation10], 4
      %s1426 = int_to_ptr.vmem [resolvable:$true] %s1425
      %s1427 = sshll.u32 %s8, 4
      %s1428 = int_to_ptr.hbm [resolvable:$true] %s1427
      %1433 = dma.vmem_to_hbm [thread:$0]  %s1426, 4096, %s1428, [#allocation4], 128, 128, 8
    $region53: #{tpu_custom_call.1} parent=1 // pred_fallthru
      _
    // Predicated region
    $region54: #{tpu_custom_call.1} parent=1 // pred_check
      _
    $region55: #{tpu_custom_call.1} parent=1 // pred_check_branch
      %1435 = sbr.rel (0) target = $region57
    $region56: #{tpu_custom_call.1} parent=1 // pred_region
      %1437 = dma.done [#allocation4], 4096
    $region57: #{tpu_custom_call.1} parent=1 // pred_fallthru
      _
    %1438 = vsyncpa [#allocation3], 1
    %1439 = vsyncpa [#allocation6], 1
    %1440 = vsyncpa [#allocation9], 1
    %1441 = vsyncpa [#allocation4], 1

</llo_original>
